<compile_context>
chip_gen: v6e
topology: v6e:2x2x1
jax: 0.10.0
libtpu: 0.0.40
codegen_flags: <defaults>
</compile_context>

<pallas_src>
import functools

import jax
import jax.numpy as jnp
from jax import lax
from jax.experimental import pallas as pl
from jax.experimental.pallas import tpu as pltpu

_LANE = 128     # lane width (last dim)
_SLAB = 16      # rows per inner step: one (16,128) tile, aligned for f32/bf16
_TR_MAX = 2048  # rows per grid block: f32 1 MiB/input; 2 in x 2 buf = 4 MiB


def _ccc_stats_kernel(p_ref, g_ref, o_ref, *, tr, r_valid, nbk):
    """Accumulate this row-block's sufficient statistics into o_ref.

    o_ref: (5, _SLAB, _LANE) f32, resident across the reduction axis k:
      [0]=sum(p) [1]=sum(g) [2]=sum(p*p) [3]=sum(g*g) [4]=sum(p*g)
    """
    c = pl.program_id(0)          # parallel chunk (feeds both TCs on v7x)
    k = pl.program_id(1)          # reduction step within the chunk
    nslab = tr // _SLAB

    @pl.when(k == 0)
    def _init():
        o_ref[...] = jnp.zeros_like(o_ref)

    # Virtual (unclamped) global row offset of this block in the (r,128) view.
    row0 = (c * nbk + k) * tr

    def accumulate(masked):
        def body(s, carry):
            sp, sg, spp, sgg, spg = carry
            start = pl.multiple_of(s * _SLAB, _SLAB)
            p = p_ref[pl.ds(start, _SLAB), :].astype(jnp.float32)
            g = g_ref[pl.ds(start, _SLAB), :].astype(jnp.float32)
            if masked:
                rows = row0 + s * _SLAB + lax.broadcasted_iota(
                    jnp.int32, (_SLAB, _LANE), 0)
                keep = rows < r_valid
                p = jnp.where(keep, p, 0.0)
                g = jnp.where(keep, g, 0.0)
            return (sp + p, sg + g, spp + p * p, sgg + g * g, spg + p * g)

        z = jnp.zeros((_SLAB, _LANE), jnp.float32)
        sp, sg, spp, sgg, spg = lax.fori_loop(
            0, nslab, body, (z, z, z, z, z), unroll=min(8, nslab))
        o_ref[0] += sp
        o_ref[1] += sg
        o_ref[2] += spp
        o_ref[3] += sgg
        o_ref[4] += spg

    # Fast path: block fully inside the valid rows -> no masking work.
    @pl.when(row0 + tr <= r_valid)
    def _full():
        accumulate(masked=False)

    # Slow path (at most once per chunk): ragged or duplicate-clamped block.
    @pl.when(row0 + tr > r_valid)
    def _ragged():
        accumulate(masked=True)


def _as_flat(x):
    """Flatten; keep a kernel-friendly float dtype (no HBM upcast for 16-bit)."""
    x = x.reshape(-1)
    if x.dtype not in (jnp.float32, jnp.bfloat16, jnp.float16):
        x = x.astype(jnp.float32)
    return x


def ccc_loss_pallas(prediction, ground_truth):
    """loss = 1 - CCC(prediction.view(-1), ground_truth.view(-1))."""
    p = _as_flat(prediction)
    g = _as_flat(ground_truth)
    n = p.shape[0]
    assert g.shape[0] == n, "prediction / ground_truth element counts differ"

    # Lane-dense 2-D view (rows, 128).  The reshape is free when n % 128 == 0;
    # jnp.pad only triggers for a ragged tail (zeros are harmless: only raw
    # sums are accumulated and the true N is used in the final formula).
    rem = n % _LANE
    if rem:
        pad = _LANE - rem
        p = jnp.pad(p, (0, pad))
        g = jnp.pad(g, (0, pad))
    r = p.shape[0] // _LANE
    p2 = p.reshape(r, _LANE)
    g2 = g.reshape(r, _LANE)

    if r < _SLAB:                       # tiny input: pad rows so block == array
        p2 = jnp.pad(p2, ((0, _SLAB - r), (0, 0)))
        g2 = jnp.pad(g2, ((0, _SLAB - r), (0, 0)))
        tr = _SLAB
        r_padded = _SLAB
    else:
        tr = min(_TR_MAX, (r // _SLAB) * _SLAB)   # multiple of 16 and <= r
        r_padded = r

    nb = pl.cdiv(r_padded, tr)          # total row blocks
    nc = 2 if nb >= 2 else 1            # size-2 parallel axis -> 2 TCs on v7x
    nbk = pl.cdiv(nb, nc)               # row blocks per parallel chunk

    kernel = functools.partial(_ccc_stats_kernel, tr=tr, r_valid=r, nbk=nbk)

    def in_map(c, k):
        # Clamp so virtual blocks past the end re-read the last real block;
        # their contribution is fully masked out in-kernel.
        return (jnp.minimum(c * nbk + k, nb - 1), 0)

    stats = pl.pallas_call(
        kernel,
        out_shape=jax.ShapeDtypeStruct((nc, 5, _SLAB, _LANE), jnp.float32),
        grid_spec=pltpu.PrefetchScalarGridSpec(
            num_scalar_prefetch=0,
            grid=(nc, nbk),
            in_specs=[
                pl.BlockSpec((tr, _LANE), in_map),
                pl.BlockSpec((tr, _LANE), in_map),
            ],
            out_specs=pl.BlockSpec((None, 5, _SLAB, _LANE),
                                   lambda c, k: (c, 0, 0, 0)),
        ),
        compiler_params=pltpu.CompilerParams(
            dimension_semantics=("parallel", "arbitrary"),
        ),
    )(p2, g2)

    # Final combine (nc*5*16*128 partials -> 5 scalars) + CCC formula: trivial,
    # done in plain JAX.
    s = jnp.sum(stats, axis=(0, 2, 3))
    sum_p, sum_g, sum_pp, sum_gg, sum_pg = s[0], s[1], s[2], s[3], s[4]
    nf = jnp.float32(n)
    mean_p = sum_p / nf
    mean_g = sum_g / nf
    # torch.var default is unbiased (N-1); cov uses torch.mean (N).
    # TODO(synk): raw-moment form can lose precision vs the centered two-pass
    # reference for very large N or large |mean|/std ratios (f32 accumulation).
    var_p = (sum_pp - nf * mean_p * mean_p) / (nf - 1.0)
    var_g = (sum_gg - nf * mean_g * mean_g) / (nf - 1.0)
    cov = (sum_pg - nf * mean_p * mean_g) / nf
    ccc = 2.0 * cov / (var_g + var_p + (mean_g - mean_p) ** 2)
    return 1.0 - ccc


def _ccc_loss_ref(prediction, ground_truth):
    p = prediction.reshape(-1).astype(jnp.float32)
    g = ground_truth.reshape(-1).astype(jnp.float32)
    mean_g = jnp.mean(g)
    mean_p = jnp.mean(p)
    var_g = jnp.var(g, ddof=1)
    var_p = jnp.var(p, ddof=1)
    cov = jnp.mean((p - mean_p) * (g - mean_g))
    ccc = 2.0 * cov / (var_g + var_p + (mean_g - mean_p) ** 2)
    return 1.0 - ccc


if __name__ == "__main__":
    key = jax.random.PRNGKey(0)
    k1, k2 = jax.random.split(key)
    # Small shapes consistent with the module (it flattens everything).
    prediction = jax.random.normal(k1, (2, 4, 16, 16), dtype=jnp.float32)
    ground_truth = 0.7 * prediction + 0.3 * jax.random.normal(
        k2, (2, 4, 16, 16), dtype=jnp.float32
    )

    loss = ccc_loss_pallas(prediction, ground_truth)
    jax.block_until_ready(loss)

    ref = _ccc_loss_ref(prediction, ground_truth)
    assert jnp.allclose(loss, ref, rtol=1e-4, atol=1e-5), (loss, ref)
    print("KERNEL_OK")
</pallas_src>

<mosaic_0001>
module attributes {stable_mosaic.version = 11 : i64} {
  func.func @_ccc_stats_kernel(%arg0: i32, %arg1: i32, %arg2: memref<16x128xf32, #tpu.memory_space<vmem>>, %arg3: memref<16x128xf32, #tpu.memory_space<vmem>>, %arg4: memref<1x5x16x128xf32, #tpu.memory_space<vmem>>) attributes {dimension_semantics = [#tpu.dimension_semantics<parallel>, #tpu.dimension_semantics<arbitrary>], iteration_bounds = array<i64: 1, 1>, scalar_prefetch = 0 : i64, scratch_operands = 0 : i64, tpu.core_type = #tpu.core_type<tc>, window_params = [{transform_indices = @transform_0, window_bounds = array<i64: 16, 128>}, {transform_indices = @transform_1, window_bounds = array<i64: 16, 128>}, {transform_indices = @transform_2, window_bounds = array<i64: 1, 5, 16, 128>}]} {
    %c0_i32 = arith.constant 0 : i32
    %0 = arith.cmpi eq, %arg1, %c0_i32 : i32
    %1 = arith.extui %0 : i1 to i32
    %c0_i32_0 = arith.constant 0 : i32
    %2 = arith.cmpi ne, %1, %c0_i32_0 : i32
    scf.if %2 {
      %cst = arith.constant 0.000000e+00 : f32
      %14 = vector.broadcast %cst : f32 to vector<5x16x128xf32>
      %c0 = arith.constant 0 : index
      %c0_7 = arith.constant 0 : index
      %c0_8 = arith.constant 0 : index
      %c0_9 = arith.constant 0 : index
      %15 = vector.load %arg4[%c0, %c0_7, %c0_8, %c0_9] : memref<1x5x16x128xf32, #tpu.memory_space<vmem>>, vector<1x5x16x128xf32>
      %16 = vector.shape_cast %15 : vector<1x5x16x128xf32> to vector<5x16x128xf32>
      %17 = vector.shape_cast %14 : vector<5x16x128xf32> to vector<1x5x16x128xf32>
      tpu.vector_store %arg4[%c0, %c0_7, %c0_8, %c0_9], %17 {strides = array<i32>} : memref<1x5x16x128xf32, #tpu.memory_space<vmem>>, vector<1x5x16x128xf32>,
    } else {
    }
    %c1_i32 = arith.constant 1 : i32
    %3 = arith.muli %arg0, %c1_i32 : i32
    %4 = arith.addi %3, %arg1 : i32
    %c16_i32 = arith.constant 16 : i32
    %5 = arith.muli %4, %c16_i32 : i32
    %c16_i32_1 = arith.constant 16 : i32
    %6 = arith.addi %5, %c16_i32_1 : i32
    %c16_i32_2 = arith.constant 16 : i32
    %7 = arith.cmpi sle, %6, %c16_i32_2 : i32
    %8 = arith.extui %7 : i1 to i32
    %c0_i32_3 = arith.constant 0 : i32
    %9 = arith.cmpi ne, %8, %c0_i32_3 : i32
    scf.if %9 {
      %cst = arith.constant 0.000000e+00 : f32
      %14 = vector.broadcast %cst : f32 to vector<16x128xf32>
      %c0_i32_7 = arith.constant 0 : i32
      %c16_i32_8 = arith.constant 16 : i32
      %15 = arith.muli %c0_i32_7, %c16_i32_8 : i32
      %16 = tpu.assume_multiple %15, 16 : i32
      %17 = arith.index_cast %16 : i32 to index
      %c0 = arith.constant 0 : index
      %18 = vector.load %arg2[%17, %c0] : memref<16x128xf32, #tpu.memory_space<vmem>>, vector<16x128xf32>
      %19 = arith.index_cast %16 : i32 to index
      %c0_9 = arith.constant 0 : index
      %20 = vector.load %arg3[%19, %c0_9] : memref<16x128xf32, #tpu.memory_space<vmem>>, vector<16x128xf32>
      %21 = arith.addf %14, %18 : vector<16x128xf32>
      %22 = arith.addf %14, %20 : vector<16x128xf32>
      %23 = arith.mulf %18, %18 : vector<16x128xf32>
      %24 = arith.addf %14, %23 : vector<16x128xf32>
      %25 = arith.mulf %20, %20 : vector<16x128xf32>
      %26 = arith.addf %14, %25 : vector<16x128xf32>
      %27 = arith.mulf %18, %20 : vector<16x128xf32>
      %28 = arith.addf %14, %27 : vector<16x128xf32>
      %c1_i32_10 = arith.constant 1 : i32
      %c0_11 = arith.constant 0 : index
      %c0_12 = arith.constant 0 : index
      %c0_13 = arith.constant 0 : index
      %c0_14 = arith.constant 0 : index
      %29 = vector.load %arg4[%c0_11, %c0_12, %c0_13, %c0_14] : memref<1x5x16x128xf32, #tpu.memory_space<vmem>>, vector<1x1x16x128xf32>
      %30 = vector.shape_cast %29 : vector<1x1x16x128xf32> to vector<16x128xf32>
      %31 = arith.addf %30, %21 : vector<16x128xf32>
      %c0_15 = arith.constant 0 : index
      %c0_16 = arith.constant 0 : index
      %c0_17 = arith.constant 0 : index
      %c0_18 = arith.constant 0 : index
      %32 = vector.load %arg4[%c0_15, %c0_16, %c0_17, %c0_18] : memref<1x5x16x128xf32, #tpu.memory_space<vmem>>, vector<1x1x16x128xf32>
      %33 = vector.shape_cast %32 : vector<1x1x16x128xf32> to vector<16x128xf32>
      %34 = vector.shape_cast %31 : vector<16x128xf32> to vector<1x1x16x128xf32>
      tpu.vector_store %arg4[%c0_15, %c0_16, %c0_17, %c0_18], %34 {strides = array<i32>} : memref<1x5x16x128xf32, #tpu.memory_space<vmem>>, vector<1x1x16x128xf32>,
      %c0_19 = arith.constant 0 : index
      %c1 = arith.constant 1 : index
      %c0_20 = arith.constant 0 : index
      %c0_21 = arith.constant 0 : index
      %35 = vector.load %arg4[%c0_19, %c1, %c0_20, %c0_21] : memref<1x5x16x128xf32, #tpu.memory_space<vmem>>, vector<1x1x16x128xf32>
      %36 = vector.shape_cast %35 : vector<1x1x16x128xf32> to vector<16x128xf32>
      %37 = arith.addf %36, %22 : vector<16x128xf32>
      %c0_22 = arith.constant 0 : index
      %c1_23 = arith.constant 1 : index
      %c0_24 = arith.constant 0 : index
      %c0_25 = arith.constant 0 : index
      %38 = vector.load %arg4[%c0_22, %c1_23, %c0_24, %c0_25] : memref<1x5x16x128xf32, #tpu.memory_space<vmem>>, vector<1x1x16x128xf32>
      %39 = vector.shape_cast %38 : vector<1x1x16x128xf32> to vector<16x128xf32>
      %40 = vector.shape_cast %37 : vector<16x128xf32> to vector<1x1x16x128xf32>
      tpu.vector_store %arg4[%c0_22, %c1_23, %c0_24, %c0_25], %40 {strides = array<i32>} : memref<1x5x16x128xf32, #tpu.memory_space<vmem>>, vector<1x1x16x128xf32>,
      %c0_26 = arith.constant 0 : index
      %c2 = arith.constant 2 : index
      %c0_27 = arith.constant 0 : index
      %c0_28 = arith.constant 0 : index
      %41 = vector.load %arg4[%c0_26, %c2, %c0_27, %c0_28] : memref<1x5x16x128xf32, #tpu.memory_space<vmem>>, vector<1x1x16x128xf32>
      %42 = vector.shape_cast %41 : vector<1x1x16x128xf32> to vector<16x128xf32>
      %43 = arith.addf %42, %24 : vector<16x128xf32>
      %c0_29 = arith.constant 0 : index
      %c2_30 = arith.constant 2 : index
      %c0_31 = arith.constant 0 : index
      %c0_32 = arith.constant 0 : index
      %44 = vector.load %arg4[%c0_29, %c2_30, %c0_31, %c0_32] : memref<1x5x16x128xf32, #tpu.memory_space<vmem>>, vector<1x1x16x128xf32>
      %45 = vector.shape_cast %44 : vector<1x1x16x128xf32> to vector<16x128xf32>
      %46 = vector.shape_cast %43 : vector<16x128xf32> to vector<1x1x16x128xf32>
      tpu.vector_store %arg4[%c0_29, %c2_30, %c0_31, %c0_32], %46 {strides = array<i32>} : memref<1x5x16x128xf32, #tpu.memory_space<vmem>>, vector<1x1x16x128xf32>,
      %c0_33 = arith.constant 0 : index
      %c3 = arith.constant 3 : index
      %c0_34 = arith.constant 0 : index
      %c0_35 = arith.constant 0 : index
      %47 = vector.load %arg4[%c0_33, %c3, %c0_34, %c0_35] : memref<1x5x16x128xf32, #tpu.memory_space<vmem>>, vector<1x1x16x128xf32>
      %48 = vector.shape_cast %47 : vector<1x1x16x128xf32> to vector<16x128xf32>
      %49 = arith.addf %48, %26 : vector<16x128xf32>
      %c0_36 = arith.constant 0 : index
      %c3_37 = arith.constant 3 : index
      %c0_38 = arith.constant 0 : index
      %c0_39 = arith.constant 0 : index
      %50 = vector.load %arg4[%c0_36, %c3_37, %c0_38, %c0_39] : memref<1x5x16x128xf32, #tpu.memory_space<vmem>>, vector<1x1x16x128xf32>
      %51 = vector.shape_cast %50 : vector<1x1x16x128xf32> to vector<16x128xf32>
      %52 = vector.shape_cast %49 : vector<16x128xf32> to vector<1x1x16x128xf32>
      tpu.vector_store %arg4[%c0_36, %c3_37, %c0_38, %c0_39], %52 {strides = array<i32>} : memref<1x5x16x128xf32, #tpu.memory_space<vmem>>, vector<1x1x16x128xf32>,
      %c0_40 = arith.constant 0 : index
      %c4 = arith.constant 4 : index
      %c0_41 = arith.constant 0 : index
      %c0_42 = arith.constant 0 : index
      %53 = vector.load %arg4[%c0_40, %c4, %c0_41, %c0_42] : memref<1x5x16x128xf32, #tpu.memory_space<vmem>>, vector<1x1x16x128xf32>
      %54 = vector.shape_cast %53 : vector<1x1x16x128xf32> to vector<16x128xf32>
      %55 = arith.addf %54, %28 : vector<16x128xf32>
      %c0_43 = arith.constant 0 : index
      %c4_44 = arith.constant 4 : index
      %c0_45 = arith.constant 0 : index
      %c0_46 = arith.constant 0 : index
      %56 = vector.load %arg4[%c0_43, %c4_44, %c0_45, %c0_46] : memref<1x5x16x128xf32, #tpu.memory_space<vmem>>, vector<1x1x16x128xf32>
      %57 = vector.shape_cast %56 : vector<1x1x16x128xf32> to vector<16x128xf32>
      %58 = vector.shape_cast %55 : vector<16x128xf32> to vector<1x1x16x128xf32>
      tpu.vector_store %arg4[%c0_43, %c4_44, %c0_45, %c0_46], %58 {strides = array<i32>} : memref<1x5x16x128xf32, #tpu.memory_space<vmem>>, vector<1x1x16x128xf32>,
    } else {
    }
    %c16_i32_4 = arith.constant 16 : i32
    %10 = arith.addi %5, %c16_i32_4 : i32
    %c16_i32_5 = arith.constant 16 : i32
    %11 = arith.cmpi sgt, %10, %c16_i32_5 : i32
    %12 = arith.extui %11 : i1 to i32
    %c0_i32_6 = arith.constant 0 : i32
    %13 = arith.cmpi ne, %12, %c0_i32_6 : i32
    scf.if %13 {
      %cst = arith.constant 0.000000e+00 : f32
      %14 = vector.broadcast %cst : f32 to vector<16x128xf32>
      %c0_i32_7 = arith.constant 0 : i32
      %c16_i32_8 = arith.constant 16 : i32
      %15 = arith.muli %c0_i32_7, %c16_i32_8 : i32
      %16 = tpu.assume_multiple %15, 16 : i32
      %17 = arith.index_cast %16 : i32 to index
      %c0 = arith.constant 0 : index
      %18 = vector.load %arg2[%17, %c0] : memref<16x128xf32, #tpu.memory_space<vmem>>, vector<16x128xf32>
      %19 = arith.index_cast %16 : i32 to index
      %c0_9 = arith.constant 0 : index
      %20 = vector.load %arg3[%19, %c0_9] : memref<16x128xf32, #tpu.memory_space<vmem>>, vector<16x128xf32>
      %c16_i32_10 = arith.constant 16 : i32
      %21 = arith.muli %c0_i32_7, %c16_i32_10 : i32
      %22 = arith.addi %5, %21 : i32
      %23 = tpu.iota {dimensions = array<i32: 0>} : vector<16x128xi32>
      %24 = vector.broadcast %22 : i32 to vector<16x128xi32>
      %25 = arith.addi %24, %23 : vector<16x128xi32>
      %c16_i32_11 = arith.constant 16 : i32
      %26 = vector.broadcast %c16_i32_11 : i32 to vector<16x128xi32>
      %27 = arith.cmpi slt, %25, %26 : vector<16x128xi32>
      %cst_12 = arith.constant 0.000000e+00 : f32
      %28 = vector.broadcast %cst_12 : f32 to vector<16x128xf32>
      %29 = arith.select %27, %18, %28 : vector<16x128xi1>, vector<16x128xf32>
      %cst_13 = arith.constant 0.000000e+00 : f32
      %30 = vector.broadcast %cst_13 : f32 to vector<16x128xf32>
      %31 = arith.select %27, %20, %30 : vector<16x128xi1>, vector<16x128xf32>
      %32 = arith.addf %14, %29 : vector<16x128xf32>
      %33 = arith.addf %14, %31 : vector<16x128xf32>
      %34 = arith.mulf %29, %29 : vector<16x128xf32>
      %35 = arith.addf %14, %34 : vector<16x128xf32>
      %36 = arith.mulf %31, %31 : vector<16x128xf32>
      %37 = arith.addf %14, %36 : vector<16x128xf32>
      %38 = arith.mulf %29, %31 : vector<16x128xf32>
      %39 = arith.addf %14, %38 : vector<16x128xf32>
      %c1_i32_14 = arith.constant 1 : i32
      %c0_15 = arith.constant 0 : index
      %c0_16 = arith.constant 0 : index
      %c0_17 = arith.constant 0 : index
      %c0_18 = arith.constant 0 : index
      %40 = vector.load %arg4[%c0_15, %c0_16, %c0_17, %c0_18] : memref<1x5x16x128xf32, #tpu.memory_space<vmem>>, vector<1x1x16x128xf32>
      %41 = vector.shape_cast %40 : vector<1x1x16x128xf32> to vector<16x128xf32>
      %42 = arith.addf %41, %32 : vector<16x128xf32>
      %c0_19 = arith.constant 0 : index
      %c0_20 = arith.constant 0 : index
      %c0_21 = arith.constant 0 : index
      %c0_22 = arith.constant 0 : index
      %43 = vector.load %arg4[%c0_19, %c0_20, %c0_21, %c0_22] : memref<1x5x16x128xf32, #tpu.memory_space<vmem>>, vector<1x1x16x128xf32>
      %44 = vector.shape_cast %43 : vector<1x1x16x128xf32> to vector<16x128xf32>
      %45 = vector.shape_cast %42 : vector<16x128xf32> to vector<1x1x16x128xf32>
      tpu.vector_store %arg4[%c0_19, %c0_20, %c0_21, %c0_22], %45 {strides = array<i32>} : memref<1x5x16x128xf32, #tpu.memory_space<vmem>>, vector<1x1x16x128xf32>,
      %c0_23 = arith.constant 0 : index
      %c1 = arith.constant 1 : index
      %c0_24 = arith.constant 0 : index
      %c0_25 = arith.constant 0 : index
      %46 = vector.load %arg4[%c0_23, %c1, %c0_24, %c0_25] : memref<1x5x16x128xf32, #tpu.memory_space<vmem>>, vector<1x1x16x128xf32>
      %47 = vector.shape_cast %46 : vector<1x1x16x128xf32> to vector<16x128xf32>
      %48 = arith.addf %47, %33 : vector<16x128xf32>
      %c0_26 = arith.constant 0 : index
      %c1_27 = arith.constant 1 : index
      %c0_28 = arith.constant 0 : index
      %c0_29 = arith.constant 0 : index
      %49 = vector.load %arg4[%c0_26, %c1_27, %c0_28, %c0_29] : memref<1x5x16x128xf32, #tpu.memory_space<vmem>>, vector<1x1x16x128xf32>
      %50 = vector.shape_cast %49 : vector<1x1x16x128xf32> to vector<16x128xf32>
      %51 = vector.shape_cast %48 : vector<16x128xf32> to vector<1x1x16x128xf32>
      tpu.vector_store %arg4[%c0_26, %c1_27, %c0_28, %c0_29], %51 {strides = array<i32>} : memref<1x5x16x128xf32, #tpu.memory_space<vmem>>, vector<1x1x16x128xf32>,
      %c0_30 = arith.constant 0 : index
      %c2 = arith.constant 2 : index
      %c0_31 = arith.constant 0 : index
      %c0_32 = arith.constant 0 : index
      %52 = vector.load %arg4[%c0_30, %c2, %c0_31, %c0_32] : memref<1x5x16x128xf32, #tpu.memory_space<vmem>>, vector<1x1x16x128xf32>
      %53 = vector.shape_cast %52 : vector<1x1x16x128xf32> to vector<16x128xf32>
      %54 = arith.addf %53, %35 : vector<16x128xf32>
      %c0_33 = arith.constant 0 : index
      %c2_34 = arith.constant 2 : index
      %c0_35 = arith.constant 0 : index
      %c0_36 = arith.constant 0 : index
      %55 = vector.load %arg4[%c0_33, %c2_34, %c0_35, %c0_36] : memref<1x5x16x128xf32, #tpu.memory_space<vmem>>, vector<1x1x16x128xf32>
      %56 = vector.shape_cast %55 : vector<1x1x16x128xf32> to vector<16x128xf32>
      %57 = vector.shape_cast %54 : vector<16x128xf32> to vector<1x1x16x128xf32>
      tpu.vector_store %arg4[%c0_33, %c2_34, %c0_35, %c0_36], %57 {strides = array<i32>} : memref<1x5x16x128xf32, #tpu.memory_space<vmem>>, vector<1x1x16x128xf32>,
      %c0_37 = arith.constant 0 : index
      %c3 = arith.constant 3 : index
      %c0_38 = arith.constant 0 : index
      %c0_39 = arith.constant 0 : index
      %58 = vector.load %arg4[%c0_37, %c3, %c0_38, %c0_39] : memref<1x5x16x128xf32, #tpu.memory_space<vmem>>, vector<1x1x16x128xf32>
      %59 = vector.shape_cast %58 : vector<1x1x16x128xf32> to vector<16x128xf32>
      %60 = arith.addf %59, %37 : vector<16x128xf32>
      %c0_40 = arith.constant 0 : index
      %c3_41 = arith.constant 3 : index
      %c0_42 = arith.constant 0 : index
      %c0_43 = arith.constant 0 : index
      %61 = vector.load %arg4[%c0_40, %c3_41, %c0_42, %c0_43] : memref<1x5x16x128xf32, #tpu.memory_space<vmem>>, vector<1x1x16x128xf32>
      %62 = vector.shape_cast %61 : vector<1x1x16x128xf32> to vector<16x128xf32>
      %63 = vector.shape_cast %60 : vector<16x128xf32> to vector<1x1x16x128xf32>
      tpu.vector_store %arg4[%c0_40, %c3_41, %c0_42, %c0_43], %63 {strides = array<i32>} : memref<1x5x16x128xf32, #tpu.memory_space<vmem>>, vector<1x1x16x128xf32>,
      %c0_44 = arith.constant 0 : index
      %c4 = arith.constant 4 : index
      %c0_45 = arith.constant 0 : index
      %c0_46 = arith.constant 0 : index
      %64 = vector.load %arg4[%c0_44, %c4, %c0_45, %c0_46] : memref<1x5x16x128xf32, #tpu.memory_space<vmem>>, vector<1x1x16x128xf32>
      %65 = vector.shape_cast %64 : vector<1x1x16x128xf32> to vector<16x128xf32>
      %66 = arith.addf %65, %39 : vector<16x128xf32>
      %c0_47 = arith.constant 0 : index
      %c4_48 = arith.constant 4 : index
      %c0_49 = arith.constant 0 : index
      %c0_50 = arith.constant 0 : index
      %67 = vector.load %arg4[%c0_47, %c4_48, %c0_49, %c0_50] : memref<1x5x16x128xf32, #tpu.memory_space<vmem>>, vector<1x1x16x128xf32>
      %68 = vector.shape_cast %67 : vector<1x1x16x128xf32> to vector<16x128xf32>
      %69 = vector.shape_cast %66 : vector<16x128xf32> to vector<1x1x16x128xf32>
      tpu.vector_store %arg4[%c0_47, %c4_48, %c0_49, %c0_50], %69 {strides = array<i32>} : memref<1x5x16x128xf32, #tpu.memory_space<vmem>>, vector<1x1x16x128xf32>,
    } else {
    }
    return
  }
  func.func @transform_0(%arg0: i32, %arg1: i32) -> (i32, i32) {
    %c1_i32 = arith.constant 1 : i32
    %0 = arith.muli %arg0, %c1_i32 : i32
    %1 = arith.addi %0, %arg1 : i32
    %c0_i32 = arith.constant 0 : i32
    %2 = arith.minsi %1, %c0_i32 : i32
    %c0_i32_0 = arith.constant 0 : i32
    %c0_i32_1 = arith.constant 0 : i32
    return %2, %c0_i32_0 : i32, i32
  }
  func.func @transform_1(%arg0: i32, %arg1: i32) -> (i32, i32) {
    %c1_i32 = arith.constant 1 : i32
    %0 = arith.muli %arg0, %c1_i32 : i32
    %1 = arith.addi %0, %arg1 : i32
    %c0_i32 = arith.constant 0 : i32
    %2 = arith.minsi %1, %c0_i32 : i32
    %c0_i32_0 = arith.constant 0 : i32
    %c0_i32_1 = arith.constant 0 : i32
    return %2, %c0_i32_0 : i32, i32
  }
  func.func @transform_2(%arg0: i32, %arg1: i32) -> (i32, i32, i32, i32) {
    %c0_i32 = arith.constant 0 : i32
    %c0_i32_0 = arith.constant 0 : i32
    %c0_i32_1 = arith.constant 0 : i32
    %c0_i32_2 = arith.constant 0 : i32
    return %arg0, %c0_i32, %c0_i32_0, %c0_i32_1 : i32, i32, i32, i32
  }
}

</mosaic_0001>

<llo_original>
// kernel: tpu_custom_call.1
$region0: #{tpu_custom_call.1}
  #allocation0 [shape = 'u32[]', space=smem, size = 0x4, offset = 0x4, fixed_abs, tag = 'smem constant byte address 0x4 - core index']
  #allocation1 [shape = 'u32[144,128]{1,0:T(1,128)}', space=vmem, size = 0x12000, scoped, tag = 'internal scratch']
  %s0 = inlined_call_operand.hbm [shape: f32[16,128], index: 0, kind: input, shape index: {}]
  %s1 = inlined_call_operand.hbm [shape: f32[16,128], index: 1, kind: input, shape index: {}]
  %s2 = inlined_call_operand.hbm [shape: f32[1,5,16,128], index: 2, kind: output, shape index: {}]
  %s3 = sld [smem:[#allocation0]]
  $region38: #{tpu_custom_call.1} parent=0
    _
  %s5 = ssub.s32 1, %s3
  %s6 = scalar_select 0, %s5, %s3
  $region1: #{tpu_custom_call.1} parent=0
    #allocation2 [shape = 'u8[8192]{0}', space=vmem, size = 0x2000, scoped, tag = 'input window, operand 0, single buffered']
    #allocation3 [shape = 's32[1]{0}', space=sflag, size = 0x4, scoped, tag = 'scoped memory for tpu_custom_call.1']
    #allocation4 [shape = 's32[1]{0}', space=sflag, size = 0x4, scoped, tag = 'scoped memory for tpu_custom_call.1']
    #allocation5 [shape = 'u8[8192]{0}', space=vmem, size = 0x2000, scoped, tag = 'input window, operand 1, single buffered']
    #allocation6 [shape = 's32[1]{0}', space=sflag, size = 0x4, scoped, tag = 'scoped memory for tpu_custom_call.1']
    #allocation7 [shape = 'u8[40960]{0}', space=vmem, size = 0xa000, scoped, tag = 'output window, operand 0, single buffered']
    %7 = vsyncpa [#allocation3], 0
    %8 = vsyncpa [#allocation6], 0
    %9 = vsyncpa [#allocation4], 0
    // Predicated region
    $region2: #{tpu_custom_call.1} parent=1 // pred_check
      _
    $region3: #{tpu_custom_call.1} parent=1 // pred_check_branch
      %11 = sbr.rel (0) target = $region5
    $region4: #{tpu_custom_call.1} parent=1 // pred_region
      %s12 = sadd.s32 0, 0
      %p13 = scmp.lt.s32.totalorder %s12, 0
      %s14 = scalar_select %p13, %s12, 0
      %s15 = smul.u32 2, %s14
      %s17 = ssub.s32 256, 256
      %18 = vsyncadd [#allocation3], %s17
      %s19 = smul.addr %s15, 128
      %s20 = scalar_lea.hbm %s0, %s19
      %s21 = sshll.u32 [#allocation2], 4
      %s22 = int_to_ptr.vmem [resolvable:$true] %s21
      %27 = dma.hbm_to_vmem [thread:$0]  %s20, 256, %s22, [#allocation3], 128, 128, 8
    $region5: #{tpu_custom_call.1} parent=1 // pred_fallthru
      _
    // Predicated region
    $region6: #{tpu_custom_call.1} parent=1 // pred_check
      _
    $region7: #{tpu_custom_call.1} parent=1 // pred_check_branch
      %29 = sbr.rel (0) target = $region9
    $region8: #{tpu_custom_call.1} parent=1 // pred_region
      %s30 = sadd.s32 0, 0
      %p31 = scmp.lt.s32.totalorder %s30, 0
      %s32 = scalar_select %p31, %s30, 0
      %s33 = smul.u32 2, %s32
      %s35 = ssub.s32 256, 256
      %36 = vsyncadd [#allocation6], %s35
      %s37 = smul.addr %s33, 128
      %s38 = scalar_lea.hbm %s1, %s37
      %s39 = sshll.u32 [#allocation5], 4
      %s40 = int_to_ptr.vmem [resolvable:$true] %s39
      %45 = dma.hbm_to_vmem [thread:$0]  %s38, 256, %s40, [#allocation6], 128, 128, 8
    $region9: #{tpu_custom_call.1} parent=1 // pred_fallthru
      _
    // Predicated region
    $region10: #{tpu_custom_call.1} parent=1 // pred_check
      _
    $region11: #{tpu_custom_call.1} parent=1 // pred_check_branch
      %47 = sbr.rel (0) target = $region13
    $region12: #{tpu_custom_call.1} parent=1 // pred_region
      %48 = dma.done [#allocation3], 256
    $region13: #{tpu_custom_call.1} parent=1 // pred_fallthru
      _
    // Predicated region
    $region14: #{tpu_custom_call.1} parent=1 // pred_check
      _
    $region15: #{tpu_custom_call.1} parent=1 // pred_check_branch
      %50 = sbr.rel (0) target = $region17
    $region16: #{tpu_custom_call.1} parent=1 // pred_region
      %51 = dma.done [#allocation6], 256
    $region17: #{tpu_custom_call.1} parent=1 // pred_fallthru
      _
    %s52 = sadd.s32 0, 0
    %p53 = scmp.lt.s32.totalorder %s52, 0
    %s54 = scalar_select %p53, %s52, 0
    %s55 = smul.u32 2, %s54
    %s56 = sadd.s32 0, 0
    %p57 = scmp.lt.s32.totalorder %s56, 0
    %s58 = scalar_select %p57, %s56, 0
    %s59 = smul.u32 2, %s58
    %p60 = scmp.eq.s32.totalorder 0, 0
    // Predicated region
    $region18: #{tpu_custom_call.1} parent=1 // pred_check
      %p61 = pneg %p60
    $region19: #{tpu_custom_call.1} parent=1 // pred_check_branch
      %63 = sbr.rel (%p61) target = $region21
    $region20: #{tpu_custom_call.1} parent=1 // pred_region
      %64 = vst [vmem:[#allocation7] sm:$0xff] 0.0
      %65 = vst [vmem:[#allocation7 + $0x8] sm:$0xff] 0.0
      %66 = vst [vmem:[#allocation7 + $0x10] sm:$0xff] 0.0
      %67 = vst [vmem:[#allocation7 + $0x18] sm:$0xff] 0.0
      %68 = vst [vmem:[#allocation7 + $0x20] sm:$0xff] 0.0
      %69 = vst [vmem:[#allocation7 + $0x28] sm:$0xff] 0.0
      %70 = vst [vmem:[#allocation7 + $0x30] sm:$0xff] 0.0
      %71 = vst [vmem:[#allocation7 + $0x38] sm:$0xff] 0.0
      %72 = vst [vmem:[#allocation7 + $0x40] sm:$0xff] 0.0
      %73 = vst [vmem:[#allocation7 + $0x48] sm:$0xff] 0.0
    $region21: #{tpu_custom_call.1} parent=1 // pred_fallthru
      _
    %s74 = sadd.s32 0, 0
    %s75 = smul.u32 %s74, 16
    %s76 = sadd.s32 %s75, 16
    %p77 = scmp.le.s32.totalorder %s76, 16
    // Predicated region
    $region22: #{tpu_custom_call.1} parent=1 // pred_check
      %p78 = pneg %p77
    $region23: #{tpu_custom_call.1} parent=1 // pred_check_branch
      %80 = sbr.rel (%p78) target = $region25
    $region24: #{tpu_custom_call.1} parent=1 // pred_region
      %v81 = vld [vmem:[#allocation2] sm:$0xff]
      %v82 = vld [vmem:[#allocation2 + $0x8] sm:$0xff]
      %v83 = vld [vmem:[#allocation5] sm:$0xff]
      %v84 = vld [vmem:[#allocation5 + $0x8] sm:$0xff]
      %v85 = vadd.f32 %v81, 0.0
      %v86 = vadd.f32 %v82, 0.0
      %v87 = vadd.f32 %v83, 0.0
      %v88 = vadd.f32 %v84, 0.0
      %v89 = vmul.f32 %v81, %v81
      %v90 = vmul.f32 %v82, %v82
      %v91 = vadd.f32 %v89, 0.0
      %v92 = vadd.f32 %v90, 0.0
      %v93 = vmul.f32 %v83, %v83
      %v94 = vmul.f32 %v84, %v84
      %v95 = vadd.f32 %v93, 0.0
      %v96 = vadd.f32 %v94, 0.0
      %v97 = vmul.f32 %v81, %v83
      %v98 = vmul.f32 %v82, %v84
      %v99 = vadd.f32 %v97, 0.0
      %v100 = vadd.f32 %v98, 0.0
      %v101 = vld [vmem:[#allocation7] sm:$0xff]
      %v102 = vld [vmem:[#allocation7 + $0x8] sm:$0xff]
      %v103 = vadd.f32 %v101, %v85
      %v104 = vadd.f32 %v102, %v86
      %105 = vst [vmem:[#allocation7] sm:$0xff] %v103
      %106 = vst [vmem:[#allocation7 + $0x8] sm:$0xff] %v104
      %s107 = scalar_lea.vmem [#allocation7], 16
      %v108 = vld [vmem:[%s107] sm:$0xff]
      %v109 = vld [vmem:[%s107 + $0x8] sm:$0xff]
      %v110 = vadd.f32 %v108, %v87
      %v111 = vadd.f32 %v109, %v88
      %112 = vst [vmem:[%s107] sm:$0xff] %v110
      %113 = vst [vmem:[%s107 + $0x8] sm:$0xff] %v111
      %s114 = scalar_lea.vmem [#allocation7], 32
      %v115 = vld [vmem:[%s114] sm:$0xff]
      %v116 = vld [vmem:[%s114 + $0x8] sm:$0xff]
      %v117 = vadd.f32 %v115, %v91
      %v118 = vadd.f32 %v116, %v92
      %119 = vst [vmem:[%s114] sm:$0xff] %v117
      %120 = vst [vmem:[%s114 + $0x8] sm:$0xff] %v118
      %s121 = scalar_lea.vmem [#allocation7], 48
      %v122 = vld [vmem:[%s121] sm:$0xff]
      %v123 = vld [vmem:[%s121 + $0x8] sm:$0xff]
      %v124 = vadd.f32 %v122, %v95
      %v125 = vadd.f32 %v123, %v96
      %126 = vst [vmem:[%s121] sm:$0xff] %v124
      %127 = vst [vmem:[%s121 + $0x8] sm:$0xff] %v125
      %s128 = scalar_lea.vmem [#allocation7], 64
      %v129 = vld [vmem:[%s128] sm:$0xff]
      %v130 = vld [vmem:[%s128 + $0x8] sm:$0xff]
      %v131 = vadd.f32 %v129, %v99
      %v132 = vadd.f32 %v130, %v100
      %133 = vst [vmem:[%s128] sm:$0xff] %v131
      %134 = vst [vmem:[%s128 + $0x8] sm:$0xff] %v132
    $region25: #{tpu_custom_call.1} parent=1 // pred_fallthru
      _
    %p135 = scmp.gt.s32.totalorder %s76, 16
    // Predicated region
    $region26: #{tpu_custom_call.1} parent=1 // pred_check
      %p136 = pneg %p135
    $region27: #{tpu_custom_call.1} parent=1 // pred_check_branch
      %138 = sbr.rel (%p136) target = $region29
    $region28: #{tpu_custom_call.1} parent=1 // pred_region
      %v139 = vld [vmem:[#allocation2] sm:$0xff]
      %v140 = vld [vmem:[#allocation2 + $0x8] sm:$0xff]
      %v141 = vld [vmem:[#allocation5] sm:$0xff]
      %v142 = vld [vmem:[#allocation5 + $0x8] sm:$0xff]
      %v143 = vlaneseq
      %v144 = vshrl.u32 %v143, 7
      %v145 = vadd.s32 %v144, 8
      %v146 = vstv %s75
      %v147 = vadd.s32 %v146, %v144
      %v148 = vadd.s32 %v146, %v145
      %vm149 = vcmp.lt.s32.totalorder %v147, 16
      %vm150 = vcmp.lt.s32.totalorder %v148, 16
      %v151 = vsel %vm149, %v139, 0.0
      %v152 = vsel %vm150, %v140, 0.0
      %v153 = vsel %vm149, %v141, 0.0
      %v154 = vsel %vm150, %v142, 0.0
      %v155 = vadd.f32 %v151, 0.0
      %v156 = vadd.f32 %v152, 0.0
      %v157 = vadd.f32 %v153, 0.0
      %v158 = vadd.f32 %v154, 0.0
      %v159 = vmul.f32 %v151, %v151
      %v160 = vmul.f32 %v152, %v152
      %v161 = vadd.f32 %v159, 0.0
      %v162 = vadd.f32 %v160, 0.0
      %v163 = vmul.f32 %v153, %v153
      %v164 = vmul.f32 %v154, %v154
      %v165 = vadd.f32 %v163, 0.0
      %v166 = vadd.f32 %v164, 0.0
      %v167 = vmul.f32 %v151, %v153
      %v168 = vmul.f32 %v152, %v154
      %v169 = vadd.f32 %v167, 0.0
      %v170 = vadd.f32 %v168, 0.0
      %v171 = vld [vmem:[#allocation7] sm:$0xff]
      %v172 = vld [vmem:[#allocation7 + $0x8] sm:$0xff]
      %v173 = vadd.f32 %v171, %v155
      %v174 = vadd.f32 %v172, %v156
      %175 = vst [vmem:[#allocation7] sm:$0xff] %v173
      %176 = vst [vmem:[#allocation7 + $0x8] sm:$0xff] %v174
      %s177 = scalar_lea.vmem [#allocation7], 16
      %v178 = vld [vmem:[%s177] sm:$0xff]
      %v179 = vld [vmem:[%s177 + $0x8] sm:$0xff]
      %v180 = vadd.f32 %v178, %v157
      %v181 = vadd.f32 %v179, %v158
      %182 = vst [vmem:[%s177] sm:$0xff] %v180
      %183 = vst [vmem:[%s177 + $0x8] sm:$0xff] %v181
      %s184 = scalar_lea.vmem [#allocation7], 32
      %v185 = vld [vmem:[%s184] sm:$0xff]
      %v186 = vld [vmem:[%s184 + $0x8] sm:$0xff]
      %v187 = vadd.f32 %v185, %v161
      %v188 = vadd.f32 %v186, %v162
      %189 = vst [vmem:[%s184] sm:$0xff] %v187
      %190 = vst [vmem:[%s184 + $0x8] sm:$0xff] %v188
      %s191 = scalar_lea.vmem [#allocation7], 48
      %v192 = vld [vmem:[%s191] sm:$0xff]
      %v193 = vld [vmem:[%s191 + $0x8] sm:$0xff]
      %v194 = vadd.f32 %v192, %v165
      %v195 = vadd.f32 %v193, %v166
      %196 = vst [vmem:[%s191] sm:$0xff] %v194
      %197 = vst [vmem:[%s191 + $0x8] sm:$0xff] %v195
      %s198 = scalar_lea.vmem [#allocation7], 64
      %v199 = vld [vmem:[%s198] sm:$0xff]
      %v200 = vld [vmem:[%s198 + $0x8] sm:$0xff]
      %v201 = vadd.f32 %v199, %v169
      %v202 = vadd.f32 %v200, %v170
      %203 = vst [vmem:[%s198] sm:$0xff] %v201
      %204 = vst [vmem:[%s198 + $0x8] sm:$0xff] %v202
    $region29: #{tpu_custom_call.1} parent=1 // pred_fallthru
      _
    // Predicated region
    $region30: #{tpu_custom_call.1} parent=1 // pred_check
      _
    $region31: #{tpu_custom_call.1} parent=1 // pred_check_branch
      %206 = sbr.rel (0) target = $region33
    $region32: #{tpu_custom_call.1} parent=1 // pred_region
      %s208 = ssub.s32 1280, 1280
      %209 = vsyncadd [#allocation4], %s208
      %s210 = sshll.u32 [#allocation7], 4
      %s211 = int_to_ptr.vmem [resolvable:$true] %s210
      %216 = dma.vmem_to_hbm [thread:$0]  %s211, 1280, %s2, [#allocation4], 128, 128, 8
    $region33: #{tpu_custom_call.1} parent=1 // pred_fallthru
      _
    // Predicated region
    $region34: #{tpu_custom_call.1} parent=1 // pred_check
      _
    $region35: #{tpu_custom_call.1} parent=1 // pred_check_branch
      %218 = sbr.rel (0) target = $region37
    $region36: #{tpu_custom_call.1} parent=1 // pred_region
      %219 = dma.done [#allocation4], 1280
    $region37: #{tpu_custom_call.1} parent=1 // pred_fallthru
      _
    %220 = vsyncpa [#allocation3], 1
    %221 = vsyncpa [#allocation6], 1
    %222 = vsyncpa [#allocation4], 1

</llo_original>
